<compile_context>
chip_gen: v5e
topology: v5e:2x2
jax: 0.10.0
libtpu: 0.0.40
codegen_flags: <defaults>
</compile_context>

<pallas_src>
import jax
import jax.numpy as jnp
from jax.experimental import pallas as pl
from jax.experimental.pallas import tpu as pltpu

_LANE = 128
_SUBLANE = 8
_MAX_TILE_ROWS = 2048   # (2048, 128) f32 = 1 MiB per block
_TINY_ROWS = _SUBLANE   # <= one (8,128) tile -> plain JAX fast path


def _round_up(x, m):
    return m * ((x + m - 1) // m)


def _affine_leaky_kernel(w_ref, b_ref, slope_ref, x_ref, o_ref):
    # Scalar reads from SMEM (scalar slots, free here).
    w = w_ref[0]
    b = b_ref[0]
    slope = slope_ref[0]
    # Pure VPU elementwise work on a lane-dense f32 tile.
    v1 = x_ref[...] * w + b
    o_ref[...] = jnp.where(v1 > 0.0, v1, v1 * slope)


def model_forward(x, weight, bias, negative_slope):
    """Forward pass of Linear(1,1) + leaky-relu-style where.

    x: (B, 1) f32, weight: (1, 1) f32, bias: (1,) or (1, 1) f32,
    negative_slope: python float / 0-d array. Returns (B, 1) f32.
    """
    B = x.shape[0]
    assert x.shape[1] == 1 and weight.shape == (1, 1)

    w_s = jnp.asarray(weight, jnp.float32).reshape(1)
    b_s = jnp.asarray(bias, jnp.float32).reshape(1)
    s_s = jnp.asarray(negative_slope, jnp.float32).reshape(1)

    x_flat = x.reshape(-1).astype(jnp.float32)
    rows = pl.cdiv(B, _LANE)

    # Tiny batch: a single-tile kernel launch is dominated by fixed overhead;
    # XLA's fused elementwise path is strictly faster.
    if rows <= _TINY_ROWS:
        v1 = x_flat * w_s[0] + b_s[0]
        out = jnp.where(v1 > 0.0, v1, v1 * s_s[0])
        return out.reshape(B, 1)

    # Tile rows: multiple of the 8-row sublane, capped at 1 MiB blocks, and
    # capped at ~half the rows so the grid keeps >= 2 steps (v7x megacore).
    tile_rows = min(_MAX_TILE_ROWS, _round_up(pl.cdiv(rows, 2), _SUBLANE))
    grid = pl.cdiv(rows, tile_rows)

    # Pad only up to a multiple of 128 (no-op for 128-aligned B).
    padded = rows * _LANE
    if padded != B:
        x_flat = jnp.pad(x_flat, (0, padded - B))
    x2d = x_flat.reshape(rows, _LANE)

    out2d = pl.pallas_call(
        _affine_leaky_kernel,
        out_shape=jax.ShapeDtypeStruct((rows, _LANE), jnp.float32),
        grid=(grid,),
        in_specs=[
            pl.BlockSpec(memory_space=pltpu.MemorySpace.SMEM),  # weight scalar
            pl.BlockSpec(memory_space=pltpu.MemorySpace.SMEM),  # bias scalar
            pl.BlockSpec(memory_space=pltpu.MemorySpace.SMEM),  # slope scalar
            pl.BlockSpec((tile_rows, _LANE), lambda i: (i, 0)),
        ],
        out_specs=pl.BlockSpec((tile_rows, _LANE), lambda i: (i, 0)),
        compiler_params=pltpu.CompilerParams(
            dimension_semantics=("parallel",)  # shard row tiles across TCs (v7x)
        ),
    )(w_s, b_s, s_s, x2d)

    out_flat = out2d.reshape(-1)
    if padded != B:
        out_flat = out_flat[:B]
    return out_flat.reshape(B, 1)


def reference_forward(x, weight, bias, negative_slope):
    v1 = x @ weight.T + jnp.asarray(bias, jnp.float32).reshape(1, -1)
    return jnp.where(v1 > 0, v1, v1 * negative_slope)


if __name__ == "__main__":
    key = jax.random.PRNGKey(0)
    kx, kw, kb, kx2, kx3 = jax.random.split(key, 5)

    negative_slope = 0.01  # Model(negative_slope=0.01)
    in_features, out_features = 1, 1

    # nn.Linear(1, 1) conventions: weight (out, in), bias (out,).
    weight = jax.random.normal(kw, (out_features, in_features), dtype=jnp.float32)
    bias = jax.random.normal(kb, (out_features,), dtype=jnp.float32)

    # Small case (spec-sized, batch=2) — tiny-batch fast path.
    B_small = 2
    x_small = jax.random.normal(kx, (B_small, in_features), dtype=jnp.float32)
    out_small = jax.block_until_ready(
        model_forward(x_small, weight, bias, negative_slope)
    )
    ref_small = reference_forward(x_small, weight, bias, negative_slope)
    assert out_small.shape == (B_small, out_features)
    assert jnp.allclose(out_small, ref_small, atol=1e-5, rtol=1e-5)

    # 128-aligned large batch — Pallas path, 2 parallel grid steps, zero
    # wrapper padding/slicing.
    B_big = 262144
    x_big = jax.random.normal(kx2, (B_big, in_features), dtype=jnp.float32)
    out_big = jax.block_until_ready(
        model_forward(x_big, weight, bias, negative_slope)
    )
    ref_big = reference_forward(x_big, weight, bias, negative_slope)
    assert out_big.shape == (B_big, out_features)
    assert jnp.allclose(out_big, ref_big, atol=1e-5, rtol=1e-5)

    # Ragged batch — Pallas path with a masked partial last block.
    B_rag = 4097
    x_rag = jax.random.normal(kx3, (B_rag, in_features), dtype=jnp.float32)
    out_rag = jax.block_until_ready(
        model_forward(x_rag, weight, bias, negative_slope)
    )
    ref_rag = reference_forward(x_rag, weight, bias, negative_slope)
    assert out_rag.shape == (B_rag, out_features)
    assert jnp.allclose(out_rag, ref_rag, atol=1e-5, rtol=1e-5)

    print("KERNEL_OK")
</pallas_src>

<mosaic_0001>
module attributes {stable_mosaic.version = 11 : i64} {
  func.func @_affine_leaky_kernel(%arg0: i32, %arg1: memref<1xf32, #tpu.memory_space<smem>>, %arg2: memref<1xf32, #tpu.memory_space<smem>>, %arg3: memref<1xf32, #tpu.memory_space<smem>>, %arg4: memref<1024x128xf32, #tpu.memory_space<vmem>>, %arg5: memref<1024x128xf32, #tpu.memory_space<vmem>>) attributes {dimension_semantics = [#tpu.dimension_semantics<parallel>], iteration_bounds = array<i64: 2>, scalar_prefetch = 0 : i64, scratch_operands = 0 : i64, tpu.core_type = #tpu.core_type<tc>, window_params = [{transform_indices = @transform_0, window_bounds = array<i64: 1>}, {transform_indices = @transform_1, window_bounds = array<i64: 1>}, {transform_indices = @transform_2, window_bounds = array<i64: 1>}, {transform_indices = @transform_3, window_bounds = array<i64: 1024, 128>}, {transform_indices = @transform_4, window_bounds = array<i64: 1024, 128>}]} {
    %c0 = arith.constant 0 : index
    %0 = memref.load %arg1[%c0] : memref<1xf32, #tpu.memory_space<smem>>
    %c0_0 = arith.constant 0 : index
    %1 = memref.load %arg2[%c0_0] : memref<1xf32, #tpu.memory_space<smem>>
    %c0_1 = arith.constant 0 : index
    %2 = memref.load %arg3[%c0_1] : memref<1xf32, #tpu.memory_space<smem>>
    %c0_2 = arith.constant 0 : index
    %c0_3 = arith.constant 0 : index
    %3 = vector.load %arg4[%c0_2, %c0_3] : memref<1024x128xf32, #tpu.memory_space<vmem>>, vector<1024x128xf32>
    %4 = vector.broadcast %0 : f32 to vector<1024x128xf32>
    %5 = arith.mulf %3, %4 : vector<1024x128xf32>
    %6 = vector.broadcast %1 : f32 to vector<1024x128xf32>
    %7 = arith.addf %5, %6 : vector<1024x128xf32>
    %cst = arith.constant 0.000000e+00 : f32
    %8 = vector.broadcast %cst : f32 to vector<1024x128xf32>
    %9 = arith.cmpf ogt, %7, %8 : vector<1024x128xf32>
    %10 = vector.broadcast %2 : f32 to vector<1024x128xf32>
    %11 = arith.mulf %7, %10 : vector<1024x128xf32>
    %12 = arith.select %9, %7, %11 : vector<1024x128xi1>, vector<1024x128xf32>
    %c0_4 = arith.constant 0 : index
    %c0_5 = arith.constant 0 : index
    %13 = vector.load %arg5[%c0_4, %c0_5] : memref<1024x128xf32, #tpu.memory_space<vmem>>, vector<1024x128xf32>
    tpu.vector_store %arg5[%c0_4, %c0_5], %12 {strides = array<i32>} : memref<1024x128xf32, #tpu.memory_space<vmem>>, vector<1024x128xf32>,
    return
  }
  func.func @transform_0(%arg0: i32) -> i32 {
    %c0_i32 = arith.constant 0 : i32
    %c0_i32_0 = arith.constant 0 : i32
    return %c0_i32 : i32
  }
  func.func @transform_1(%arg0: i32) -> i32 {
    %c0_i32 = arith.constant 0 : i32
    %c0_i32_0 = arith.constant 0 : i32
    return %c0_i32 : i32
  }
  func.func @transform_2(%arg0: i32) -> i32 {
    %c0_i32 = arith.constant 0 : i32
    %c0_i32_0 = arith.constant 0 : i32
    return %c0_i32 : i32
  }
  func.func @transform_3(%arg0: i32) -> (i32, i32) {
    %c0_i32 = arith.constant 0 : i32
    %c0_i32_0 = arith.constant 0 : i32
    return %arg0, %c0_i32 : i32, i32
  }
  func.func @transform_4(%arg0: i32) -> (i32, i32) {
    %c0_i32 = arith.constant 0 : i32
    %c0_i32_0 = arith.constant 0 : i32
    return %arg0, %c0_i32 : i32, i32
  }
}

</mosaic_0001>

<llo_original>
// kernel: tpu_custom_call.1
$region0: #{tpu_custom_call.1}
  #allocation0 [shape = 'u32[]', space=smem, size = 0x4, offset = 0x4, fixed_abs, tag = 'smem constant byte address 0x4 - core index']
  #allocation1 [shape = 'u32[72,128]{1,0:T(1,128)}', space=vmem, size = 0x9000, scoped, tag = 'internal scratch']
  #allocation2 [shape = 'f32[1]{0:T(128)S(6)}', space=smem, size = 0x200, scoped, tag = 'scoped memory for tpu_custom_call.1']
  #allocation3 [shape = 'f32[1]{0:T(128)S(6)}', space=smem, size = 0x200, scoped, tag = 'scoped memory for tpu_custom_call.1']
  #allocation4 [shape = 'f32[1]{0:T(128)S(6)}', space=smem, size = 0x200, scoped, tag = 'scoped memory for tpu_custom_call.1']
  %s0 = inlined_call_operand.<no memory space> [shape: f32[1], index: 0, kind: input, shape index: {}]
  %s1 = inlined_call_operand.<no memory space> [shape: f32[1], index: 1, kind: input, shape index: {}]
  %s2 = inlined_call_operand.<no memory space> [shape: f32[1], index: 2, kind: input, shape index: {}]
  %s3 = inlined_call_operand.hbm [shape: f32[2048,128], index: 3, kind: input, shape index: {}]
  %s4 = inlined_call_operand.hbm [shape: f32[2048,128], index: 4, kind: output, shape index: {}]
  %s5 = sld [smem:[#allocation0]]
  $region53: #{tpu_custom_call.1} parent=0
    _
  %s7 = ssub.s32 1, %s5
  %s8 = scalar_select 0, %s7, %s5
  %9 = sst [smem:[#allocation2]] %s0
  %10 = sst [smem:[#allocation3]] %s1
  %11 = sst [smem:[#allocation4]] %s2
  $region1: #{tpu_custom_call.1} parent=0
    #allocation5 [shape = 'u8[1048576]{0}', space=vmem, size = 0x100000, scoped, tag = 'input window, operand 3']
    #allocation6 [shape = 's32[2]{0}', space=sflag, size = 0x8, scoped, tag = 'scoped memory for tpu_custom_call.1']
    #allocation7 [shape = 's32[2]{0}', space=sflag, size = 0x8, scoped, tag = 'scoped memory for tpu_custom_call.1']
    #allocation8 [shape = 'u8[1048576]{0}', space=vmem, size = 0x100000, scoped, tag = 'output window, operand 0']
    %12 = vsyncpa [#allocation6], 0
    %s13 = scalar_lea.sflag [#allocation6], 1
    %14 = vsyncpa %s13, 0
    %15 = vsyncpa [#allocation7], 0
    %s16 = scalar_lea.sflag [#allocation7], 1
    %17 = vsyncpa %s16, 0
    loop: start=0, step=1, limit=4
    $region2: #{tpu_custom_call.1} parent=1 // loop_pre_header
      _
    $region3: #{tpu_custom_call.1} parent=1 // loop_header
      %s19 = sphi 0, %s23
      %p20 = scmp.ge.s32.totalorder %s19, 4
      %s27 = sphi 0, %s27
      %s29 = sphi 0, %s27
      %s30 = sphi 0, %s29
      %s44 = sphi 0, %s30
      %s48 = sphi 0, %s48
      %s50 = sphi 0, %s48
      %s51 = sphi 0, %s50
      %s65 = sphi 0, %s51
      %s69 = sphi 0, %s69
      %s71 = sphi 0, %s69
      %s72 = sphi 0, %s71
      %s86 = sphi 0, %s72
      %s92 = sphi 0, %s94
      %s95 = sphi 0, %s92
      %s96 = sphi 0, %s95
      %s112 = sphi 0, %s96
      %s118 = sphi 0, %s120
      %s121 = sphi 0, %s118
      %s122 = sphi 0, %s121
      %s138 = sphi 0, %s122
    $region4: #{tpu_custom_call.1} parent=1 // loop_header_branch
      %22 = sbr.rel (%p20) target = $region8
    $region5: #{tpu_custom_call.1} parent=1 // loop_body
      %s24 = ssub.s32 %s19, 1
      %s25 = ssub.s32 %s19, 2
      %s26 = sadd.s32 %s19, 1
      %s28 = sadd.s32 %s27, 1
      %p31 = scmp.eq.s32.totalorder %s19, 1
      %p32 = scmp.ne.s32.totalorder %s27, %s29
      %p33 = scmp.eq.s32.totalorder %s19, 0
      %p34 = por %p32, %p33
      %p35 = scmp.ne.s32.totalorder %s27, %s29
      %p36 = scmp.eq.s32.totalorder %s24, 1
      %p37 = por %p35, %p36
      %p38 = scmp.ne.s32.totalorder %s29, %s30
      %p39 = scmp.eq.s32.totalorder %s24, 0
      %p40 = por %p38, %p39
      %p41 = scmp.ne.s32.totalorder %s29, %s30
      %p42 = scmp.eq.s32.totalorder %s25, 1
      %p43 = por %p41, %p42
      %p45 = scmp.ne.s32.totalorder %s30, %s44
      %p46 = scmp.eq.s32.totalorder %s25, 0
      %p47 = por %p45, %p46
      %s49 = sadd.s32 %s48, 1
      %p52 = scmp.eq.s32.totalorder %s19, 1
      %p53 = scmp.ne.s32.totalorder %s48, %s50
      %p54 = scmp.eq.s32.totalorder %s19, 0
      %p55 = por %p53, %p54
      %p56 = scmp.ne.s32.totalorder %s48, %s50
      %p57 = scmp.eq.s32.totalorder %s24, 1
      %p58 = por %p56, %p57
      %p59 = scmp.ne.s32.totalorder %s50, %s51
      %p60 = scmp.eq.s32.totalorder %s24, 0
      %p61 = por %p59, %p60
      %p62 = scmp.ne.s32.totalorder %s50, %s51
      %p63 = scmp.eq.s32.totalorder %s25, 1
      %p64 = por %p62, %p63
      %p66 = scmp.ne.s32.totalorder %s51, %s65
      %p67 = scmp.eq.s32.totalorder %s25, 0
      %p68 = por %p66, %p67
      %s70 = sadd.s32 %s69, 1
      %p73 = scmp.eq.s32.totalorder %s19, 1
      %p74 = scmp.ne.s32.totalorder %s69, %s71
      %p75 = scmp.eq.s32.totalorder %s19, 0
      %p76 = por %p74, %p75
      %p77 = scmp.ne.s32.totalorder %s69, %s71
      %p78 = scmp.eq.s32.totalorder %s24, 1
      %p79 = por %p77, %p78
      %p80 = scmp.ne.s32.totalorder %s71, %s72
      %p81 = scmp.eq.s32.totalorder %s24, 0
      %p82 = por %p80, %p81
      %p83 = scmp.ne.s32.totalorder %s71, %s72
      %p84 = scmp.eq.s32.totalorder %s25, 1
      %p85 = por %p83, %p84
      %p87 = scmp.ne.s32.totalorder %s72, %s86
      %p88 = scmp.eq.s32.totalorder %s25, 0
      %p89 = por %p87, %p88
      %s90 = ssub.s32 %s19, %s26
      %p91 = scmp.eq.s32.totalorder %s90, 0
      %s93 = sadd.s32 %s92, 1
      %s94 = scalar_select %p91, %s92, %s93
      %p97 = pneg %p91
      %p98 = scmp.eq.s32.totalorder %s19, 1
      %p99 = por %p97, %p98
      %p100 = scmp.ne.s32.totalorder %s92, %s95
      %p101 = scmp.eq.s32.totalorder %s19, 0
      %p102 = por %p100, %p101
      %p103 = scmp.ne.s32.totalorder %s92, %s95
      %p104 = scmp.eq.s32.totalorder %s24, 1
      %p105 = por %p103, %p104
      %p106 = scmp.ne.s32.totalorder %s95, %s96
      %p107 = scmp.eq.s32.totalorder %s24, 0
      %p108 = por %p106, %p107
      %p109 = scmp.ne.s32.totalorder %s95, %s96
      %p110 = scmp.eq.s32.totalorder %s25, 1
      %p111 = por %p109, %p110
      %p113 = scmp.ne.s32.totalorder %s96, %s112
      %p114 = scmp.eq.s32.totalorder %s25, 0
      %p115 = por %p113, %p114
      %s116 = ssub.s32 %s19, %s26
      %p117 = scmp.eq.s32.totalorder %s116, 0
      %s119 = sadd.s32 %s118, 1
      %s120 = scalar_select %p117, %s118, %s119
      %p123 = pneg %p117
      %p124 = scmp.eq.s32.totalorder %s19, 1
      %p125 = por %p123, %p124
      %p126 = scmp.ne.s32.totalorder %s118, %s121
      %p127 = scmp.eq.s32.totalorder %s19, 0
      %p128 = por %p126, %p127
      %p129 = scmp.ne.s32.totalorder %s118, %s121
      %p130 = scmp.eq.s32.totalorder %s24, 1
      %p131 = por %p129, %p130
      %p132 = scmp.ne.s32.totalorder %s121, %s122
      %p133 = scmp.eq.s32.totalorder %s24, 0
      %p134 = por %p132, %p133
      %p135 = scmp.ne.s32.totalorder %s121, %s122
      %p136 = scmp.eq.s32.totalorder %s25, 1
      %p137 = por %p135, %p136
      %p139 = scmp.ne.s32.totalorder %s122, %s138
      %p140 = scmp.eq.s32.totalorder %s25, 0
      %p141 = por %p139, %p140
      %p142 = scmp.le.s32.totalorder 1, %s19
      %p143 = scmp.lt.s32.totalorder %s19, 3
      %p144 = pnand %p142, %p143
      %p145 = pneg %p144
      // Predicated region
      $region9: #{tpu_custom_call.1} parent=5 // pred_check
        _
      $region10: #{tpu_custom_call.1} parent=5 // pred_check_branch
        %147 = sbr.rel (%p144) target = $region12
      $region11: #{tpu_custom_call.1} parent=5 // pred_region
        %s148 = ssub.s32 %s19, 1
        // Predicated region
        $region13: #{tpu_custom_call.1} parent=11 // pred_check
          %p149 = pneg %p40
        $region14: #{tpu_custom_call.1} parent=11 // pred_check_branch
          %151 = sbr.rel (%p149) target = $region16
        $region15: #{tpu_custom_call.1} parent=11 // pred_region
          _
        $region16: #{tpu_custom_call.1} parent=11 // pred_fallthru
          _
        // Predicated region
        $region17: #{tpu_custom_call.1} parent=11 // pred_check
          %p152 = pneg %p61
        $region18: #{tpu_custom_call.1} parent=11 // pred_check_branch
          %154 = sbr.rel (%p152) target = $region20
        $region19: #{tpu_custom_call.1} parent=11 // pred_region
          _
        $region20: #{tpu_custom_call.1} parent=11 // pred_fallthru
          _
        // Predicated region
        $region21: #{tpu_custom_call.1} parent=11 // pred_check
          %p155 = pneg %p82
        $region22: #{tpu_custom_call.1} parent=11 // pred_check_branch
          %157 = sbr.rel (%p155) target = $region24
        $region23: #{tpu_custom_call.1} parent=11 // pred_region
          _
        $region24: #{tpu_custom_call.1} parent=11 // pred_fallthru
          _
      $region12: #{tpu_custom_call.1} parent=5 // pred_fallthru
        _
      %p158 = scmp.lt.s32.totalorder %s19, 2
      // Predicated region
      $region25: #{tpu_custom_call.1} parent=5 // pred_check
        %p159 = pneg %p158
      $region26: #{tpu_custom_call.1} parent=5 // pred_check_branch
        %161 = sbr.rel (%p159) target = $region28
      $region27: #{tpu_custom_call.1} parent=5 // pred_region
        // Predicated region
        $region29: #{tpu_custom_call.1} parent=27 // pred_check
          %p162 = pneg %p102
        $region30: #{tpu_custom_call.1} parent=27 // pred_check_branch
          %164 = sbr.rel (%p162) target = $region32
        $region31: #{tpu_custom_call.1} parent=27 // pred_region
          %s165 = sand.u32 %s92, 1
          %s166 = scalar_lea.sflag [#allocation6], %s165
          %s167 = sand.u32 %s92, 1
          %s168 = smul.addr %s167, 1024
          %s169 = scalar_lea.vmem [#allocation5], %s168
          %s170 = smul.u32 128, %s19
          %172 = vsyncadd %s166, 0
          %s173 = smul.addr %s170, 8
          %s174 = scalar_lea.hbm %s3, %s173
          %s175 = sshll.u32 %s174, 4
          %s176 = int_to_ptr.hbm [resolvable:$true] %s175
          %s177 = sshll.u32 %s169, 4
          %s178 = int_to_ptr.vmem [resolvable:$true] %s177
          %183 = dma.hbm_to_vmem [thread:$0]  %s176, 16384, %s178, %s166, 128, 128, 8
        $region32: #{tpu_custom_call.1} parent=27 // pred_fallthru
          _
      $region28: #{tpu_custom_call.1} parent=5 // pred_fallthru
        _
      %p184 = scmp.le.s32.totalorder 1, %s19
      %p185 = scmp.lt.s32.totalorder %s19, 3
      %p186 = pnand %p184, %p185
      %p187 = pneg %p186
      // Predicated region
      $region33: #{tpu_custom_call.1} parent=5 // pred_check
        _
      $region34: #{tpu_custom_call.1} parent=5 // pred_check_branch
        %189 = sbr.rel (%p186) target = $region36
      $region35: #{tpu_custom_call.1} parent=5 // pred_region
        %s190 = ssub.s32 %s19, 1
        %s191 = sand.u32 %s95, 1
        %s192 = scalar_lea.sflag [#allocation6], %s191
        %s193 = sand.u32 %s95, 1
        %s194 = smul.addr %s193, 1024
        %s195 = scalar_lea.vmem [#allocation5], %s194
        // Predicated region
        $region37: #{tpu_custom_call.1} parent=35 // pred_check
          %p196 = pneg %p108
        $region38: #{tpu_custom_call.1} parent=35 // pred_check_branch
          %198 = sbr.rel (%p196) target = $region40
        $region39: #{tpu_custom_call.1} parent=35 // pred_region
          %200 = dma.done %s192, 16384
        $region40: #{tpu_custom_call.1} parent=35 // pred_fallthru
          _
        %p201 = pneg %p40
        %p202 = pneg %p37
        %p203 = pneg %p61
        %p204 = pneg %p58
        %p205 = pneg %p82
        %p206 = pneg %p79
        %s207 = sand.u32 %s95, 1
        %s208 = scalar_lea.sflag [#allocation6], %s207
        %s209 = sand.u32 %s95, 1
        %s210 = smul.addr %s209, 1024
        %s211 = scalar_lea.vmem [#allocation5], %s210
        %p212 = pneg %p108
        %p213 = pneg %p105
        %p214 = pneg %p134
        %p215 = pneg %p131
        %s216 = sand.u32 %s121, 1
        %s217 = scalar_lea.sflag [#allocation7], %s216
        %s218 = sand.u32 %s121, 1
        %s219 = smul.addr %s218, 1024
        %s220 = scalar_lea.vmem [#allocation8], %s219
        %s221 = smul.u32 128, %s24
        %s222 = smul.u32 128, %s24
        %s223 = sld [smem:[#allocation2]]
        %s224 = sld [smem:[#allocation3]]
        %s225 = sld [smem:[#allocation4]]
        %v226 = vld [vmem:[%s195] sm:$0xff]
        %v227 = vld [vmem:[%s195 + $0x8] sm:$0xff]
        %v228 = vld [vmem:[%s195 + $0x10] sm:$0xff]
        %v229 = vld [vmem:[%s195 + $0x18] sm:$0xff]
        %v230 = vld [vmem:[%s195 + $0x20] sm:$0xff]
        %v231 = vld [vmem:[%s195 + $0x28] sm:$0xff]
        %v232 = vld [vmem:[%s195 + $0x30] sm:$0xff]
        %v233 = vld [vmem:[%s195 + $0x38] sm:$0xff]
        %v234 = vld [vmem:[%s195 + $0x40] sm:$0xff]
        %v235 = vld [vmem:[%s195 + $0x48] sm:$0xff]
        %v236 = vld [vmem:[%s195 + $0x50] sm:$0xff]
        %v237 = vld [vmem:[%s195 + $0x58] sm:$0xff]
        %v238 = vld [vmem:[%s195 + $0x60] sm:$0xff]
        %v239 = vld [vmem:[%s195 + $0x68] sm:$0xff]
        %v240 = vld [vmem:[%s195 + $0x70] sm:$0xff]
        %v241 = vld [vmem:[%s195 + $0x78] sm:$0xff]
        %v242 = vld [vmem:[%s195 + $0x80] sm:$0xff]
        %v243 = vld [vmem:[%s195 + $0x88] sm:$0xff]
        %v244 = vld [vmem:[%s195 + $0x90] sm:$0xff]
        %v245 = vld [vmem:[%s195 + $0x98] sm:$0xff]
        %v246 = vld [vmem:[%s195 + $0xa0] sm:$0xff]
        %v247 = vld [vmem:[%s195 + $0xa8] sm:$0xff]
        %v248 = vld [vmem:[%s195 + $0xb0] sm:$0xff]
        %v249 = vld [vmem:[%s195 + $0xb8] sm:$0xff]
        %v250 = vld [vmem:[%s195 + $0xc0] sm:$0xff]
        %v251 = vld [vmem:[%s195 + $0xc8] sm:$0xff]
        %v252 = vld [vmem:[%s195 + $0xd0] sm:$0xff]
        %v253 = vld [vmem:[%s195 + $0xd8] sm:$0xff]
        %v254 = vld [vmem:[%s195 + $0xe0] sm:$0xff]
        %v255 = vld [vmem:[%s195 + $0xe8] sm:$0xff]
        %v256 = vld [vmem:[%s195 + $0xf0] sm:$0xff]
        %v257 = vld [vmem:[%s195 + $0xf8] sm:$0xff]
        %v258 = vld [vmem:[%s195 + $0x100] sm:$0xff]
        %v259 = vld [vmem:[%s195 + $0x108] sm:$0xff]
        %v260 = vld [vmem:[%s195 + $0x110] sm:$0xff]
        %v261 = vld [vmem:[%s195 + $0x118] sm:$0xff]
        %v262 = vld [vmem:[%s195 + $0x120] sm:$0xff]
        %v263 = vld [vmem:[%s195 + $0x128] sm:$0xff]
        %v264 = vld [vmem:[%s195 + $0x130] sm:$0xff]
        %v265 = vld [vmem:[%s195 + $0x138] sm:$0xff]
        %v266 = vld [vmem:[%s195 + $0x140] sm:$0xff]
        %v267 = vld [vmem:[%s195 + $0x148] sm:$0xff]
        %v268 = vld [vmem:[%s195 + $0x150] sm:$0xff]
        %v269 = vld [vmem:[%s195 + $0x158] sm:$0xff]
        %v270 = vld [vmem:[%s195 + $0x160] sm:$0xff]
        %v271 = vld [vmem:[%s195 + $0x168] sm:$0xff]
        %v272 = vld [vmem:[%s195 + $0x170] sm:$0xff]
        %v273 = vld [vmem:[%s195 + $0x178] sm:$0xff]
        %v274 = vld [vmem:[%s195 + $0x180] sm:$0xff]
        %v275 = vld [vmem:[%s195 + $0x188] sm:$0xff]
        %v276 = vld [vmem:[%s195 + $0x190] sm:$0xff]
        %v277 = vld [vmem:[%s195 + $0x198] sm:$0xff]
        %v278 = vld [vmem:[%s195 + $0x1a0] sm:$0xff]
        %v279 = vld [vmem:[%s195 + $0x1a8] sm:$0xff]
        %v280 = vld [vmem:[%s195 + $0x1b0] sm:$0xff]
        %v281 = vld [vmem:[%s195 + $0x1b8] sm:$0xff]
        %v282 = vld [vmem:[%s195 + $0x1c0] sm:$0xff]
        %v283 = vld [vmem:[%s195 + $0x1c8] sm:$0xff]
        %v284 = vld [vmem:[%s195 + $0x1d0] sm:$0xff]
        %v285 = vld [vmem:[%s195 + $0x1d8] sm:$0xff]
        %v286 = vld [vmem:[%s195 + $0x1e0] sm:$0xff]
        %v287 = vld [vmem:[%s195 + $0x1e8] sm:$0xff]
        %v288 = vld [vmem:[%s195 + $0x1f0] sm:$0xff]
        %v289 = vld [vmem:[%s195 + $0x1f8] sm:$0xff]
        %v290 = vld [vmem:[%s195 + $0x200] sm:$0xff]
        %v291 = vld [vmem:[%s195 + $0x208] sm:$0xff]
        %v292 = vld [vmem:[%s195 + $0x210] sm:$0xff]
        %v293 = vld [vmem:[%s195 + $0x218] sm:$0xff]
        %v294 = vld [vmem:[%s195 + $0x220] sm:$0xff]
        %v295 = vld [vmem:[%s195 + $0x228] sm:$0xff]
        %v296 = vld [vmem:[%s195 + $0x230] sm:$0xff]
        %v297 = vld [vmem:[%s195 + $0x238] sm:$0xff]
        %v298 = vld [vmem:[%s195 + $0x240] sm:$0xff]
        %v299 = vld [vmem:[%s195 + $0x248] sm:$0xff]
        %v300 = vld [vmem:[%s195 + $0x250] sm:$0xff]
        %v301 = vld [vmem:[%s195 + $0x258] sm:$0xff]
        %v302 = vld [vmem:[%s195 + $0x260] sm:$0xff]
        %v303 = vld [vmem:[%s195 + $0x268] sm:$0xff]
        %v304 = vld [vmem:[%s195 + $0x270] sm:$0xff]
        %v305 = vld [vmem:[%s195 + $0x278] sm:$0xff]
        %v306 = vld [vmem:[%s195 + $0x280] sm:$0xff]
        %v307 = vld [vmem:[%s195 + $0x288] sm:$0xff]
        %v308 = vld [vmem:[%s195 + $0x290] sm:$0xff]
        %v309 = vld [vmem:[%s195 + $0x298] sm:$0xff]
        %v310 = vld [vmem:[%s195 + $0x2a0] sm:$0xff]
        %v311 = vld [vmem:[%s195 + $0x2a8] sm:$0xff]
        %v312 = vld [vmem:[%s195 + $0x2b0] sm:$0xff]
        %v313 = vld [vmem:[%s195 + $0x2b8] sm:$0xff]
        %v314 = vld [vmem:[%s195 + $0x2c0] sm:$0xff]
        %v315 = vld [vmem:[%s195 + $0x2c8] sm:$0xff]
        %v316 = vld [vmem:[%s195 + $0x2d0] sm:$0xff]
        %v317 = vld [vmem:[%s195 + $0x2d8] sm:$0xff]
        %v318 = vld [vmem:[%s195 + $0x2e0] sm:$0xff]
        %v319 = vld [vmem:[%s195 + $0x2e8] sm:$0xff]
        %v320 = vld [vmem:[%s195 + $0x2f0] sm:$0xff]
        %v321 = vld [vmem:[%s195 + $0x2f8] sm:$0xff]
        %v322 = vld [vmem:[%s195 + $0x300] sm:$0xff]
        %v323 = vld [vmem:[%s195 + $0x308] sm:$0xff]
        %v324 = vld [vmem:[%s195 + $0x310] sm:$0xff]
        %v325 = vld [vmem:[%s195 + $0x318] sm:$0xff]
        %v326 = vld [vmem:[%s195 + $0x320] sm:$0xff]
        %v327 = vld [vmem:[%s195 + $0x328] sm:$0xff]
        %v328 = vld [vmem:[%s195 + $0x330] sm:$0xff]
        %v329 = vld [vmem:[%s195 + $0x338] sm:$0xff]
        %v330 = vld [vmem:[%s195 + $0x340] sm:$0xff]
        %v331 = vld [vmem:[%s195 + $0x348] sm:$0xff]
        %v332 = vld [vmem:[%s195 + $0x350] sm:$0xff]
        %v333 = vld [vmem:[%s195 + $0x358] sm:$0xff]
        %v334 = vld [vmem:[%s195 + $0x360] sm:$0xff]
        %v335 = vld [vmem:[%s195 + $0x368] sm:$0xff]
        %v336 = vld [vmem:[%s195 + $0x370] sm:$0xff]
        %v337 = vld [vmem:[%s195 + $0x378] sm:$0xff]
        %v338 = vld [vmem:[%s195 + $0x380] sm:$0xff]
        %v339 = vld [vmem:[%s195 + $0x388] sm:$0xff]
        %v340 = vld [vmem:[%s195 + $0x390] sm:$0xff]
        %v341 = vld [vmem:[%s195 + $0x398] sm:$0xff]
        %v342 = vld [vmem:[%s195 + $0x3a0] sm:$0xff]
        %v343 = vld [vmem:[%s195 + $0x3a8] sm:$0xff]
        %v344 = vld [vmem:[%s195 + $0x3b0] sm:$0xff]
        %v345 = vld [vmem:[%s195 + $0x3b8] sm:$0xff]
        %v346 = vld [vmem:[%s195 + $0x3c0] sm:$0xff]
        %v347 = vld [vmem:[%s195 + $0x3c8] sm:$0xff]
        %v348 = vld [vmem:[%s195 + $0x3d0] sm:$0xff]
        %v349 = vld [vmem:[%s195 + $0x3d8] sm:$0xff]
        %v350 = vld [vmem:[%s195 + $0x3e0] sm:$0xff]
        %v351 = vld [vmem:[%s195 + $0x3e8] sm:$0xff]
        %v352 = vld [vmem:[%s195 + $0x3f0] sm:$0xff]
        %v353 = vld [vmem:[%s195 + $0x3f8] sm:$0xff]
        %v354 = vstv %s223
        %v355 = vmul.f32 %v226, %v354
        %v356 = vmul.f32 %v227, %v354
        %v357 = vmul.f32 %v228, %v354
        %v358 = vmul.f32 %v229, %v354
        %v359 = vmul.f32 %v230, %v354
        %v360 = vmul.f32 %v231, %v354
        %v361 = vmul.f32 %v232, %v354
        %v362 = vmul.f32 %v233, %v354
        %v363 = vmul.f32 %v234, %v354
        %v364 = vmul.f32 %v235, %v354
        %v365 = vmul.f32 %v236, %v354
        %v366 = vmul.f32 %v237, %v354
        %v367 = vmul.f32 %v238, %v354
        %v368 = vmul.f32 %v239, %v354
        %v369 = vmul.f32 %v240, %v354
        %v370 = vmul.f32 %v241, %v354
        %v371 = vmul.f32 %v242, %v354
        %v372 = vmul.f32 %v243, %v354
        %v373 = vmul.f32 %v244, %v354
        %v374 = vmul.f32 %v245, %v354
        %v375 = vmul.f32 %v246, %v354
        %v376 = vmul.f32 %v247, %v354
        %v377 = vmul.f32 %v248, %v354
        %v378 = vmul.f32 %v249, %v354
        %v379 = vmul.f32 %v250, %v354
        %v380 = vmul.f32 %v251, %v354
        %v381 = vmul.f32 %v252, %v354
        %v382 = vmul.f32 %v253, %v354
        %v383 = vmul.f32 %v254, %v354
        %v384 = vmul.f32 %v255, %v354
        %v385 = vmul.f32 %v256, %v354
        %v386 = vmul.f32 %v257, %v354
        %v387 = vmul.f32 %v258, %v354
        %v388 = vmul.f32 %v259, %v354
        %v389 = vmul.f32 %v260, %v354
        %v390 = vmul.f32 %v261, %v354
        %v391 = vmul.f32 %v262, %v354
        %v392 = vmul.f32 %v263, %v354
        %v393 = vmul.f32 %v264, %v354
        %v394 = vmul.f32 %v265, %v354
        %v395 = vmul.f32 %v266, %v354
        %v396 = vmul.f32 %v267, %v354
        %v397 = vmul.f32 %v268, %v354
        %v398 = vmul.f32 %v269, %v354
        %v399 = vmul.f32 %v270, %v354
        %v400 = vmul.f32 %v271, %v354
        %v401 = vmul.f32 %v272, %v354
        %v402 = vmul.f32 %v273, %v354
        %v403 = vmul.f32 %v274, %v354
        %v404 = vmul.f32 %v275, %v354
        %v405 = vmul.f32 %v276, %v354
        %v406 = vmul.f32 %v277, %v354
        %v407 = vmul.f32 %v278, %v354
        %v408 = vmul.f32 %v279, %v354
        %v409 = vmul.f32 %v280, %v354
        %v410 = vmul.f32 %v281, %v354
        %v411 = vmul.f32 %v282, %v354
        %v412 = vmul.f32 %v283, %v354
        %v413 = vmul.f32 %v284, %v354
        %v414 = vmul.f32 %v285, %v354
        %v415 = vmul.f32 %v286, %v354
        %v416 = vmul.f32 %v287, %v354
        %v417 = vmul.f32 %v288, %v354
        %v418 = vmul.f32 %v289, %v354
        %v419 = vmul.f32 %v290, %v354
        %v420 = vmul.f32 %v291, %v354
        %v421 = vmul.f32 %v292, %v354
        %v422 = vmul.f32 %v293, %v354
        %v423 = vmul.f32 %v294, %v354
        %v424 = vmul.f32 %v295, %v354
        %v425 = vmul.f32 %v296, %v354
        %v426 = vmul.f32 %v297, %v354
        %v427 = vmul.f32 %v298, %v354
        %v428 = vmul.f32 %v299, %v354
        %v429 = vmul.f32 %v300, %v354
        %v430 = vmul.f32 %v301, %v354
        %v431 = vmul.f32 %v302, %v354
        %v432 = vmul.f32 %v303, %v354
        %v433 = vmul.f32 %v304, %v354
        %v434 = vmul.f32 %v305, %v354
        %v435 = vmul.f32 %v306, %v354
        %v436 = vmul.f32 %v307, %v354
        %v437 = vmul.f32 %v308, %v354
        %v438 = vmul.f32 %v309, %v354
        %v439 = vmul.f32 %v310, %v354
        %v440 = vmul.f32 %v311, %v354
        %v441 = vmul.f32 %v312, %v354
        %v442 = vmul.f32 %v313, %v354
        %v443 = vmul.f32 %v314, %v354
        %v444 = vmul.f32 %v315, %v354
        %v445 = vmul.f32 %v316, %v354
        %v446 = vmul.f32 %v317, %v354
        %v447 = vmul.f32 %v318, %v354
        %v448 = vmul.f32 %v319, %v354
        %v449 = vmul.f32 %v320, %v354
        %v450 = vmul.f32 %v321, %v354
        %v451 = vmul.f32 %v322, %v354
        %v452 = vmul.f32 %v323, %v354
        %v453 = vmul.f32 %v324, %v354
        %v454 = vmul.f32 %v325, %v354
        %v455 = vmul.f32 %v326, %v354
        %v456 = vmul.f32 %v327, %v354
        %v457 = vmul.f32 %v328, %v354
        %v458 = vmul.f32 %v329, %v354
        %v459 = vmul.f32 %v330, %v354
        %v460 = vmul.f32 %v331, %v354
        %v461 = vmul.f32 %v332, %v354
        %v462 = vmul.f32 %v333, %v354
        %v463 = vmul.f32 %v334, %v354
        %v464 = vmul.f32 %v335, %v354
        %v465 = vmul.f32 %v336, %v354
        %v466 = vmul.f32 %v337, %v354
        %v467 = vmul.f32 %v338, %v354
        %v468 = vmul.f32 %v339, %v354
        %v469 = vmul.f32 %v340, %v354
        %v470 = vmul.f32 %v341, %v354
        %v471 = vmul.f32 %v342, %v354
        %v472 = vmul.f32 %v343, %v354
        %v473 = vmul.f32 %v344, %v354
        %v474 = vmul.f32 %v345, %v354
        %v475 = vmul.f32 %v346, %v354
        %v476 = vmul.f32 %v347, %v354
        %v477 = vmul.f32 %v348, %v354
        %v478 = vmul.f32 %v349, %v354
        %v479 = vmul.f32 %v350, %v354
        %v480 = vmul.f32 %v351, %v354
        %v481 = vmul.f32 %v352, %v354
        %v482 = vmul.f32 %v353, %v354
        %v483 = vstv %s224
        %v484 = vadd.f32 %v355, %v483
        %v485 = vadd.f32 %v356, %v483
        %v486 = vadd.f32 %v357, %v483
        %v487 = vadd.f32 %v358, %v483
        %v488 = vadd.f32 %v359, %v483
        %v489 = vadd.f32 %v360, %v483
        %v490 = vadd.f32 %v361, %v483
        %v491 = vadd.f32 %v362, %v483
        %v492 = vadd.f32 %v363, %v483
        %v493 = vadd.f32 %v364, %v483
        %v494 = vadd.f32 %v365, %v483
        %v495 = vadd.f32 %v366, %v483
        %v496 = vadd.f32 %v367, %v483
        %v497 = vadd.f32 %v368, %v483
        %v498 = vadd.f32 %v369, %v483
        %v499 = vadd.f32 %v370, %v483
        %v500 = vadd.f32 %v371, %v483
        %v501 = vadd.f32 %v372, %v483
        %v502 = vadd.f32 %v373, %v483
        %v503 = vadd.f32 %v374, %v483
        %v504 = vadd.f32 %v375, %v483
        %v505 = vadd.f32 %v376, %v483
        %v506 = vadd.f32 %v377, %v483
        %v507 = vadd.f32 %v378, %v483
        %v508 = vadd.f32 %v379, %v483
        %v509 = vadd.f32 %v380, %v483
        %v510 = vadd.f32 %v381, %v483
        %v511 = vadd.f32 %v382, %v483
        %v512 = vadd.f32 %v383, %v483
        %v513 = vadd.f32 %v384, %v483
        %v514 = vadd.f32 %v385, %v483
        %v515 = vadd.f32 %v386, %v483
        %v516 = vadd.f32 %v387, %v483
        %v517 = vadd.f32 %v388, %v483
        %v518 = vadd.f32 %v389, %v483
        %v519 = vadd.f32 %v390, %v483
        %v520 = vadd.f32 %v391, %v483
        %v521 = vadd.f32 %v392, %v483
        %v522 = vadd.f32 %v393, %v483
        %v523 = vadd.f32 %v394, %v483
        %v524 = vadd.f32 %v395, %v483
        %v525 = vadd.f32 %v396, %v483
        %v526 = vadd.f32 %v397, %v483
        %v527 = vadd.f32 %v398, %v483
        %v528 = vadd.f32 %v399, %v483
        %v529 = vadd.f32 %v400, %v483
        %v530 = vadd.f32 %v401, %v483
        %v531 = vadd.f32 %v402, %v483
        %v532 = vadd.f32 %v403, %v483
        %v533 = vadd.f32 %v404, %v483
        %v534 = vadd.f32 %v405, %v483
        %v535 = vadd.f32 %v406, %v483
        %v536 = vadd.f32 %v407, %v483
        %v537 = vadd.f32 %v408, %v483
        %v538 = vadd.f32 %v409, %v483
        %v539 = vadd.f32 %v410, %v483
        %v540 = vadd.f32 %v411, %v483
        %v541 = vadd.f32 %v412, %v483
        %v542 = vadd.f32 %v413, %v483
        %v543 = vadd.f32 %v414, %v483
        %v544 = vadd.f32 %v415, %v483
        %v545 = vadd.f32 %v416, %v483
        %v546 = vadd.f32 %v417, %v483
        %v547 = vadd.f32 %v418, %v483
        %v548 = vadd.f32 %v419, %v483
        %v549 = vadd.f32 %v420, %v483
        %v550 = vadd.f32 %v421, %v483
        %v551 = vadd.f32 %v422, %v483
        %v552 = vadd.f32 %v423, %v483
        %v553 = vadd.f32 %v424, %v483
        %v554 = vadd.f32 %v425, %v483
        %v555 = vadd.f32 %v426, %v483
        %v556 = vadd.f32 %v427, %v483
        %v557 = vadd.f32 %v428, %v483
        %v558 = vadd.f32 %v429, %v483
        %v559 = vadd.f32 %v430, %v483
        %v560 = vadd.f32 %v431, %v483
        %v561 = vadd.f32 %v432, %v483
        %v562 = vadd.f32 %v433, %v483
        %v563 = vadd.f32 %v434, %v483
        %v564 = vadd.f32 %v435, %v483
        %v565 = vadd.f32 %v436, %v483
        %v566 = vadd.f32 %v437, %v483
        %v567 = vadd.f32 %v438, %v483
        %v568 = vadd.f32 %v439, %v483
        %v569 = vadd.f32 %v440, %v483
        %v570 = vadd.f32 %v441, %v483
        %v571 = vadd.f32 %v442, %v483
        %v572 = vadd.f32 %v443, %v483
        %v573 = vadd.f32 %v444, %v483
        %v574 = vadd.f32 %v445, %v483
        %v575 = vadd.f32 %v446, %v483
        %v576 = vadd.f32 %v447, %v483
        %v577 = vadd.f32 %v448, %v483
        %v578 = vadd.f32 %v449, %v483
        %v579 = vadd.f32 %v450, %v483
        %v580 = vadd.f32 %v451, %v483
        %v581 = vadd.f32 %v452, %v483
        %v582 = vadd.f32 %v453, %v483
        %v583 = vadd.f32 %v454, %v483
        %v584 = vadd.f32 %v455, %v483
        %v585 = vadd.f32 %v456, %v483
        %v586 = vadd.f32 %v457, %v483
        %v587 = vadd.f32 %v458, %v483
        %v588 = vadd.f32 %v459, %v483
        %v589 = vadd.f32 %v460, %v483
        %v590 = vadd.f32 %v461, %v483
        %v591 = vadd.f32 %v462, %v483
        %v592 = vadd.f32 %v463, %v483
        %v593 = vadd.f32 %v464, %v483
        %v594 = vadd.f32 %v465, %v483
        %v595 = vadd.f32 %v466, %v483
        %v596 = vadd.f32 %v467, %v483
        %v597 = vadd.f32 %v468, %v483
        %v598 = vadd.f32 %v469, %v483
        %v599 = vadd.f32 %v470, %v483
        %v600 = vadd.f32 %v471, %v483
        %v601 = vadd.f32 %v472, %v483
        %v602 = vadd.f32 %v473, %v483
        %v603 = vadd.f32 %v474, %v483
        %v604 = vadd.f32 %v475, %v483
        %v605 = vadd.f32 %v476, %v483
        %v606 = vadd.f32 %v477, %v483
        %v607 = vadd.f32 %v478, %v483
        %v608 = vadd.f32 %v479, %v483
        %v609 = vadd.f32 %v480, %v483
        %v610 = vadd.f32 %v481, %v483
        %v611 = vadd.f32 %v482, %v483
        %vm612 = vcmp.gt.f32.partialorder %v484, 0.0
        %vm613 = vcmp.gt.f32.partialorder %v485, 0.0
        %vm614 = vcmp.gt.f32.partialorder %v486, 0.0
        %vm615 = vcmp.gt.f32.partialorder %v487, 0.0
        %vm616 = vcmp.gt.f32.partialorder %v488, 0.0
        %vm617 = vcmp.gt.f32.partialorder %v489, 0.0
        %vm618 = vcmp.gt.f32.partialorder %v490, 0.0
        %vm619 = vcmp.gt.f32.partialorder %v491, 0.0
        %vm620 = vcmp.gt.f32.partialorder %v492, 0.0
        %vm621 = vcmp.gt.f32.partialorder %v493, 0.0
        %vm622 = vcmp.gt.f32.partialorder %v494, 0.0
        %vm623 = vcmp.gt.f32.partialorder %v495, 0.0
        %vm624 = vcmp.gt.f32.partialorder %v496, 0.0
        %vm625 = vcmp.gt.f32.partialorder %v497, 0.0
        %vm626 = vcmp.gt.f32.partialorder %v498, 0.0
        %vm627 = vcmp.gt.f32.partialorder %v499, 0.0
        %vm628 = vcmp.gt.f32.partialorder %v500, 0.0
        %vm629 = vcmp.gt.f32.partialorder %v501, 0.0
        %vm630 = vcmp.gt.f32.partialorder %v502, 0.0
        %vm631 = vcmp.gt.f32.partialorder %v503, 0.0
        %vm632 = vcmp.gt.f32.partialorder %v504, 0.0
        %vm633 = vcmp.gt.f32.partialorder %v505, 0.0
        %vm634 = vcmp.gt.f32.partialorder %v506, 0.0
        %vm635 = vcmp.gt.f32.partialorder %v507, 0.0
        %vm636 = vcmp.gt.f32.partialorder %v508, 0.0
        %vm637 = vcmp.gt.f32.partialorder %v509, 0.0
        %vm638 = vcmp.gt.f32.partialorder %v510, 0.0
        %vm639 = vcmp.gt.f32.partialorder %v511, 0.0
        %vm640 = vcmp.gt.f32.partialorder %v512, 0.0
        %vm641 = vcmp.gt.f32.partialorder %v513, 0.0
        %vm642 = vcmp.gt.f32.partialorder %v514, 0.0
        %vm643 = vcmp.gt.f32.partialorder %v515, 0.0
        %vm644 = vcmp.gt.f32.partialorder %v516, 0.0
        %vm645 = vcmp.gt.f32.partialorder %v517, 0.0
        %vm646 = vcmp.gt.f32.partialorder %v518, 0.0
        %vm647 = vcmp.gt.f32.partialorder %v519, 0.0
        %vm648 = vcmp.gt.f32.partialorder %v520, 0.0
        %vm649 = vcmp.gt.f32.partialorder %v521, 0.0
        %vm650 = vcmp.gt.f32.partialorder %v522, 0.0
        %vm651 = vcmp.gt.f32.partialorder %v523, 0.0
        %vm652 = vcmp.gt.f32.partialorder %v524, 0.0
        %vm653 = vcmp.gt.f32.partialorder %v525, 0.0
        %vm654 = vcmp.gt.f32.partialorder %v526, 0.0
        %vm655 = vcmp.gt.f32.partialorder %v527, 0.0
        %vm656 = vcmp.gt.f32.partialorder %v528, 0.0
        %vm657 = vcmp.gt.f32.partialorder %v529, 0.0
        %vm658 = vcmp.gt.f32.partialorder %v530, 0.0
        %vm659 = vcmp.gt.f32.partialorder %v531, 0.0
        %vm660 = vcmp.gt.f32.partialorder %v532, 0.0
        %vm661 = vcmp.gt.f32.partialorder %v533, 0.0
        %vm662 = vcmp.gt.f32.partialorder %v534, 0.0
        %vm663 = vcmp.gt.f32.partialorder %v535, 0.0
        %vm664 = vcmp.gt.f32.partialorder %v536, 0.0
        %vm665 = vcmp.gt.f32.partialorder %v537, 0.0
        %vm666 = vcmp.gt.f32.partialorder %v538, 0.0
        %vm667 = vcmp.gt.f32.partialorder %v539, 0.0
        %vm668 = vcmp.gt.f32.partialorder %v540, 0.0
        %vm669 = vcmp.gt.f32.partialorder %v541, 0.0
        %vm670 = vcmp.gt.f32.partialorder %v542, 0.0
        %vm671 = vcmp.gt.f32.partialorder %v543, 0.0
        %vm672 = vcmp.gt.f32.partialorder %v544, 0.0
        %vm673 = vcmp.gt.f32.partialorder %v545, 0.0
        %vm674 = vcmp.gt.f32.partialorder %v546, 0.0
        %vm675 = vcmp.gt.f32.partialorder %v547, 0.0
        %vm676 = vcmp.gt.f32.partialorder %v548, 0.0
        %vm677 = vcmp.gt.f32.partialorder %v549, 0.0
        %vm678 = vcmp.gt.f32.partialorder %v550, 0.0
        %vm679 = vcmp.gt.f32.partialorder %v551, 0.0
        %vm680 = vcmp.gt.f32.partialorder %v552, 0.0
        %vm681 = vcmp.gt.f32.partialorder %v553, 0.0
        %vm682 = vcmp.gt.f32.partialorder %v554, 0.0
        %vm683 = vcmp.gt.f32.partialorder %v555, 0.0
        %vm684 = vcmp.gt.f32.partialorder %v556, 0.0
        %vm685 = vcmp.gt.f32.partialorder %v557, 0.0
        %vm686 = vcmp.gt.f32.partialorder %v558, 0.0
        %vm687 = vcmp.gt.f32.partialorder %v559, 0.0
        %vm688 = vcmp.gt.f32.partialorder %v560, 0.0
        %vm689 = vcmp.gt.f32.partialorder %v561, 0.0
        %vm690 = vcmp.gt.f32.partialorder %v562, 0.0
        %vm691 = vcmp.gt.f32.partialorder %v563, 0.0
        %vm692 = vcmp.gt.f32.partialorder %v564, 0.0
        %vm693 = vcmp.gt.f32.partialorder %v565, 0.0
        %vm694 = vcmp.gt.f32.partialorder %v566, 0.0
        %vm695 = vcmp.gt.f32.partialorder %v567, 0.0
        %vm696 = vcmp.gt.f32.partialorder %v568, 0.0
        %vm697 = vcmp.gt.f32.partialorder %v569, 0.0
        %vm698 = vcmp.gt.f32.partialorder %v570, 0.0
        %vm699 = vcmp.gt.f32.partialorder %v571, 0.0
        %vm700 = vcmp.gt.f32.partialorder %v572, 0.0
        %vm701 = vcmp.gt.f32.partialorder %v573, 0.0
        %vm702 = vcmp.gt.f32.partialorder %v574, 0.0
        %vm703 = vcmp.gt.f32.partialorder %v575, 0.0
        %vm704 = vcmp.gt.f32.partialorder %v576, 0.0
        %vm705 = vcmp.gt.f32.partialorder %v577, 0.0
        %vm706 = vcmp.gt.f32.partialorder %v578, 0.0
        %vm707 = vcmp.gt.f32.partialorder %v579, 0.0
        %vm708 = vcmp.gt.f32.partialorder %v580, 0.0
        %vm709 = vcmp.gt.f32.partialorder %v581, 0.0
        %vm710 = vcmp.gt.f32.partialorder %v582, 0.0
        %vm711 = vcmp.gt.f32.partialorder %v583, 0.0
        %vm712 = vcmp.gt.f32.partialorder %v584, 0.0
        %vm713 = vcmp.gt.f32.partialorder %v585, 0.0
        %vm714 = vcmp.gt.f32.partialorder %v586, 0.0
        %vm715 = vcmp.gt.f32.partialorder %v587, 0.0
        %vm716 = vcmp.gt.f32.partialorder %v588, 0.0
        %vm717 = vcmp.gt.f32.partialorder %v589, 0.0
        %vm718 = vcmp.gt.f32.partialorder %v590, 0.0
        %vm719 = vcmp.gt.f32.partialorder %v591, 0.0
        %vm720 = vcmp.gt.f32.partialorder %v592, 0.0
        %vm721 = vcmp.gt.f32.partialorder %v593, 0.0
        %vm722 = vcmp.gt.f32.partialorder %v594, 0.0
        %vm723 = vcmp.gt.f32.partialorder %v595, 0.0
        %vm724 = vcmp.gt.f32.partialorder %v596, 0.0
        %vm725 = vcmp.gt.f32.partialorder %v597, 0.0
        %vm726 = vcmp.gt.f32.partialorder %v598, 0.0
        %vm727 = vcmp.gt.f32.partialorder %v599, 0.0
        %vm728 = vcmp.gt.f32.partialorder %v600, 0.0
        %vm729 = vcmp.gt.f32.partialorder %v601, 0.0
        %vm730 = vcmp.gt.f32.partialorder %v602, 0.0
        %vm731 = vcmp.gt.f32.partialorder %v603, 0.0
        %vm732 = vcmp.gt.f32.partialorder %v604, 0.0
        %vm733 = vcmp.gt.f32.partialorder %v605, 0.0
        %vm734 = vcmp.gt.f32.partialorder %v606, 0.0
        %vm735 = vcmp.gt.f32.partialorder %v607, 0.0
        %vm736 = vcmp.gt.f32.partialorder %v608, 0.0
        %vm737 = vcmp.gt.f32.partialorder %v609, 0.0
        %vm738 = vcmp.gt.f32.partialorder %v610, 0.0
        %vm739 = vcmp.gt.f32.partialorder %v611, 0.0
        %v740 = vstv %s225
        %v741 = vmul.f32 %v484, %v740
        %v742 = vmul.f32 %v485, %v740
        %v743 = vmul.f32 %v486, %v740
        %v744 = vmul.f32 %v487, %v740
        %v745 = vmul.f32 %v488, %v740
        %v746 = vmul.f32 %v489, %v740
        %v747 = vmul.f32 %v490, %v740
        %v748 = vmul.f32 %v491, %v740
        %v749 = vmul.f32 %v492, %v740
        %v750 = vmul.f32 %v493, %v740
        %v751 = vmul.f32 %v494, %v740
        %v752 = vmul.f32 %v495, %v740
        %v753 = vmul.f32 %v496, %v740
        %v754 = vmul.f32 %v497, %v740
        %v755 = vmul.f32 %v498, %v740
        %v756 = vmul.f32 %v499, %v740
        %v757 = vmul.f32 %v500, %v740
        %v758 = vmul.f32 %v501, %v740
        %v759 = vmul.f32 %v502, %v740
        %v760 = vmul.f32 %v503, %v740
        %v761 = vmul.f32 %v504, %v740
        %v762 = vmul.f32 %v505, %v740
        %v763 = vmul.f32 %v506, %v740
        %v764 = vmul.f32 %v507, %v740
        %v765 = vmul.f32 %v508, %v740
        %v766 = vmul.f32 %v509, %v740
        %v767 = vmul.f32 %v510, %v740
        %v768 = vmul.f32 %v511, %v740
        %v769 = vmul.f32 %v512, %v740
        %v770 = vmul.f32 %v513, %v740
        %v771 = vmul.f32 %v514, %v740
        %v772 = vmul.f32 %v515, %v740
        %v773 = vmul.f32 %v516, %v740
        %v774 = vmul.f32 %v517, %v740
        %v775 = vmul.f32 %v518, %v740
        %v776 = vmul.f32 %v519, %v740
        %v777 = vmul.f32 %v520, %v740
        %v778 = vmul.f32 %v521, %v740
        %v779 = vmul.f32 %v522, %v740
        %v780 = vmul.f32 %v523, %v740
        %v781 = vmul.f32 %v524, %v740
        %v782 = vmul.f32 %v525, %v740
        %v783 = vmul.f32 %v526, %v740
        %v784 = vmul.f32 %v527, %v740
        %v785 = vmul.f32 %v528, %v740
        %v786 = vmul.f32 %v529, %v740
        %v787 = vmul.f32 %v530, %v740
        %v788 = vmul.f32 %v531, %v740
        %v789 = vmul.f32 %v532, %v740
        %v790 = vmul.f32 %v533, %v740
        %v791 = vmul.f32 %v534, %v740
        %v792 = vmul.f32 %v535, %v740
        %v793 = vmul.f32 %v536, %v740
        %v794 = vmul.f32 %v537, %v740
        %v795 = vmul.f32 %v538, %v740
        %v796 = vmul.f32 %v539, %v740
        %v797 = vmul.f32 %v540, %v740
        %v798 = vmul.f32 %v541, %v740
        %v799 = vmul.f32 %v542, %v740
        %v800 = vmul.f32 %v543, %v740
        %v801 = vmul.f32 %v544, %v740
        %v802 = vmul.f32 %v545, %v740
        %v803 = vmul.f32 %v546, %v740
        %v804 = vmul.f32 %v547, %v740
        %v805 = vmul.f32 %v548, %v740
        %v806 = vmul.f32 %v549, %v740
        %v807 = vmul.f32 %v550, %v740
        %v808 = vmul.f32 %v551, %v740
        %v809 = vmul.f32 %v552, %v740
        %v810 = vmul.f32 %v553, %v740
        %v811 = vmul.f32 %v554, %v740
        %v812 = vmul.f32 %v555, %v740
        %v813 = vmul.f32 %v556, %v740
        %v814 = vmul.f32 %v557, %v740
        %v815 = vmul.f32 %v558, %v740
        %v816 = vmul.f32 %v559, %v740
        %v817 = vmul.f32 %v560, %v740
        %v818 = vmul.f32 %v561, %v740
        %v819 = vmul.f32 %v562, %v740
        %v820 = vmul.f32 %v563, %v740
        %v821 = vmul.f32 %v564, %v740
        %v822 = vmul.f32 %v565, %v740
        %v823 = vmul.f32 %v566, %v740
        %v824 = vmul.f32 %v567, %v740
        %v825 = vmul.f32 %v568, %v740
        %v826 = vmul.f32 %v569, %v740
        %v827 = vmul.f32 %v570, %v740
        %v828 = vmul.f32 %v571, %v740
        %v829 = vmul.f32 %v572, %v740
        %v830 = vmul.f32 %v573, %v740
        %v831 = vmul.f32 %v574, %v740
        %v832 = vmul.f32 %v575, %v740
        %v833 = vmul.f32 %v576, %v740
        %v834 = vmul.f32 %v577, %v740
        %v835 = vmul.f32 %v578, %v740
        %v836 = vmul.f32 %v579, %v740
        %v837 = vmul.f32 %v580, %v740
        %v838 = vmul.f32 %v581, %v740
        %v839 = vmul.f32 %v582, %v740
        %v840 = vmul.f32 %v583, %v740
        %v841 = vmul.f32 %v584, %v740
        %v842 = vmul.f32 %v585, %v740
        %v843 = vmul.f32 %v586, %v740
        %v844 = vmul.f32 %v587, %v740
        %v845 = vmul.f32 %v588, %v740
        %v846 = vmul.f32 %v589, %v740
        %v847 = vmul.f32 %v590, %v740
        %v848 = vmul.f32 %v591, %v740
        %v849 = vmul.f32 %v592, %v740
        %v850 = vmul.f32 %v593, %v740
        %v851 = vmul.f32 %v594, %v740
        %v852 = vmul.f32 %v595, %v740
        %v853 = vmul.f32 %v596, %v740
        %v854 = vmul.f32 %v597, %v740
        %v855 = vmul.f32 %v598, %v740
        %v856 = vmul.f32 %v599, %v740
        %v857 = vmul.f32 %v600, %v740
        %v858 = vmul.f32 %v601, %v740
        %v859 = vmul.f32 %v602, %v740
        %v860 = vmul.f32 %v603, %v740
        %v861 = vmul.f32 %v604, %v740
        %v862 = vmul.f32 %v605, %v740
        %v863 = vmul.f32 %v606, %v740
        %v864 = vmul.f32 %v607, %v740
        %v865 = vmul.f32 %v608, %v740
        %v866 = vmul.f32 %v609, %v740
        %v867 = vmul.f32 %v610, %v740
        %v868 = vmul.f32 %v611, %v740
        %v869 = vsel %vm612, %v484, %v741
        %v870 = vsel %vm613, %v485, %v742
        %v871 = vsel %vm614, %v486, %v743
        %v872 = vsel %vm615, %v487, %v744
        %v873 = vsel %vm616, %v488, %v745
        %v874 = vsel %vm617, %v489, %v746
        %v875 = vsel %vm618, %v490, %v747
        %v876 = vsel %vm619, %v491, %v748
        %v877 = vsel %vm620, %v492, %v749
        %v878 = vsel %vm621, %v493, %v750
        %v879 = vsel %vm622, %v494, %v751
        %v880 = vsel %vm623, %v495, %v752
        %v881 = vsel %vm624, %v496, %v753
        %v882 = vsel %vm625, %v497, %v754
        %v883 = vsel %vm626, %v498, %v755
        %v884 = vsel %vm627, %v499, %v756
        %v885 = vsel %vm628, %v500, %v757
        %v886 = vsel %vm629, %v501, %v758
        %v887 = vsel %vm630, %v502, %v759
        %v888 = vsel %vm631, %v503, %v760
        %v889 = vsel %vm632, %v504, %v761
        %v890 = vsel %vm633, %v505, %v762
        %v891 = vsel %vm634, %v506, %v763
        %v892 = vsel %vm635, %v507, %v764
        %v893 = vsel %vm636, %v508, %v765
        %v894 = vsel %vm637, %v509, %v766
        %v895 = vsel %vm638, %v510, %v767
        %v896 = vsel %vm639, %v511, %v768
        %v897 = vsel %vm640, %v512, %v769
        %v898 = vsel %vm641, %v513, %v770
        %v899 = vsel %vm642, %v514, %v771
        %v900 = vsel %vm643, %v515, %v772
        %v901 = vsel %vm644, %v516, %v773
        %v902 = vsel %vm645, %v517, %v774
        %v903 = vsel %vm646, %v518, %v775
        %v904 = vsel %vm647, %v519, %v776
        %v905 = vsel %vm648, %v520, %v777
        %v906 = vsel %vm649, %v521, %v778
        %v907 = vsel %vm650, %v522, %v779
        %v908 = vsel %vm651, %v523, %v780
        %v909 = vsel %vm652, %v524, %v781
        %v910 = vsel %vm653, %v525, %v782
        %v911 = vsel %vm654, %v526, %v783
        %v912 = vsel %vm655, %v527, %v784
        %v913 = vsel %vm656, %v528, %v785
        %v914 = vsel %vm657, %v529, %v786
        %v915 = vsel %vm658, %v530, %v787
        %v916 = vsel %vm659, %v531, %v788
        %v917 = vsel %vm660, %v532, %v789
        %v918 = vsel %vm661, %v533, %v790
        %v919 = vsel %vm662, %v534, %v791
        %v920 = vsel %vm663, %v535, %v792
        %v921 = vsel %vm664, %v536, %v793
        %v922 = vsel %vm665, %v537, %v794
        %v923 = vsel %vm666, %v538, %v795
        %v924 = vsel %vm667, %v539, %v796
        %v925 = vsel %vm668, %v540, %v797
        %v926 = vsel %vm669, %v541, %v798
        %v927 = vsel %vm670, %v542, %v799
        %v928 = vsel %vm671, %v543, %v800
        %v929 = vsel %vm672, %v544, %v801
        %v930 = vsel %vm673, %v545, %v802
        %v931 = vsel %vm674, %v546, %v803
        %v932 = vsel %vm675, %v547, %v804
        %v933 = vsel %vm676, %v548, %v805
        %v934 = vsel %vm677, %v549, %v806
        %v935 = vsel %vm678, %v550, %v807
        %v936 = vsel %vm679, %v551, %v808
        %v937 = vsel %vm680, %v552, %v809
        %v938 = vsel %vm681, %v553, %v810
        %v939 = vsel %vm682, %v554, %v811
        %v940 = vsel %vm683, %v555, %v812
        %v941 = vsel %vm684, %v556, %v813
        %v942 = vsel %vm685, %v557, %v814
        %v943 = vsel %vm686, %v558, %v815
        %v944 = vsel %vm687, %v559, %v816
        %v945 = vsel %vm688, %v560, %v817
        %v946 = vsel %vm689, %v561, %v818
        %v947 = vsel %vm690, %v562, %v819
        %v948 = vsel %vm691, %v563, %v820
        %v949 = vsel %vm692, %v564, %v821
        %v950 = vsel %vm693, %v565, %v822
        %v951 = vsel %vm694, %v566, %v823
        %v952 = vsel %vm695, %v567, %v824
        %v953 = vsel %vm696, %v568, %v825
        %v954 = vsel %vm697, %v569, %v826
        %v955 = vsel %vm698, %v570, %v827
        %v956 = vsel %vm699, %v571, %v828
        %v957 = vsel %vm700, %v572, %v829
        %v958 = vsel %vm701, %v573, %v830
        %v959 = vsel %vm702, %v574, %v831
        %v960 = vsel %vm703, %v575, %v832
        %v961 = vsel %vm704, %v576, %v833
        %v962 = vsel %vm705, %v577, %v834
        %v963 = vsel %vm706, %v578, %v835
        %v964 = vsel %vm707, %v579, %v836
        %v965 = vsel %vm708, %v580, %v837
        %v966 = vsel %vm709, %v581, %v838
        %v967 = vsel %vm710, %v582, %v839
        %v968 = vsel %vm711, %v583, %v840
        %v969 = vsel %vm712, %v584, %v841
        %v970 = vsel %vm713, %v585, %v842
        %v971 = vsel %vm714, %v586, %v843
        %v972 = vsel %vm715, %v587, %v844
        %v973 = vsel %vm716, %v588, %v845
        %v974 = vsel %vm717, %v589, %v846
        %v975 = vsel %vm718, %v590, %v847
        %v976 = vsel %vm719, %v591, %v848
        %v977 = vsel %vm720, %v592, %v849
        %v978 = vsel %vm721, %v593, %v850
        %v979 = vsel %vm722, %v594, %v851
        %v980 = vsel %vm723, %v595, %v852
        %v981 = vsel %vm724, %v596, %v853
        %v982 = vsel %vm725, %v597, %v854
        %v983 = vsel %vm726, %v598, %v855
        %v984 = vsel %vm727, %v599, %v856
        %v985 = vsel %vm728, %v600, %v857
        %v986 = vsel %vm729, %v601, %v858
        %v987 = vsel %vm730, %v602, %v859
        %v988 = vsel %vm731, %v603, %v860
        %v989 = vsel %vm732, %v604, %v861
        %v990 = vsel %vm733, %v605, %v862
        %v991 = vsel %vm734, %v606, %v863
        %v992 = vsel %vm735, %v607, %v864
        %v993 = vsel %vm736, %v608, %v865
        %v994 = vsel %vm737, %v609, %v866
        %v995 = vsel %vm738, %v610, %v867
        %v996 = vsel %vm739, %v611, %v868
        %997 = vst [vmem:[%s220] sm:$0xff] %v869
        %998 = vst [vmem:[%s220 + $0x8] sm:$0xff] %v870
        %999 = vst [vmem:[%s220 + $0x10] sm:$0xff] %v871
        %1000 = vst [vmem:[%s220 + $0x18] sm:$0xff] %v872
        %1001 = vst [vmem:[%s220 + $0x20] sm:$0xff] %v873
        %1002 = vst [vmem:[%s220 + $0x28] sm:$0xff] %v874
        %1003 = vst [vmem:[%s220 + $0x30] sm:$0xff] %v875
        %1004 = vst [vmem:[%s220 + $0x38] sm:$0xff] %v876
        %1005 = vst [vmem:[%s220 + $0x40] sm:$0xff] %v877
        %1006 = vst [vmem:[%s220 + $0x48] sm:$0xff] %v878
        %1007 = vst [vmem:[%s220 + $0x50] sm:$0xff] %v879
        %1008 = vst [vmem:[%s220 + $0x58] sm:$0xff] %v880
        %1009 = vst [vmem:[%s220 + $0x60] sm:$0xff] %v881
        %1010 = vst [vmem:[%s220 + $0x68] sm:$0xff] %v882
        %1011 = vst [vmem:[%s220 + $0x70] sm:$0xff] %v883
        %1012 = vst [vmem:[%s220 + $0x78] sm:$0xff] %v884
        %1013 = vst [vmem:[%s220 + $0x80] sm:$0xff] %v885
        %1014 = vst [vmem:[%s220 + $0x88] sm:$0xff] %v886
        %1015 = vst [vmem:[%s220 + $0x90] sm:$0xff] %v887
        %1016 = vst [vmem:[%s220 + $0x98] sm:$0xff] %v888
        %1017 = vst [vmem:[%s220 + $0xa0] sm:$0xff] %v889
        %1018 = vst [vmem:[%s220 + $0xa8] sm:$0xff] %v890
        %1019 = vst [vmem:[%s220 + $0xb0] sm:$0xff] %v891
        %1020 = vst [vmem:[%s220 + $0xb8] sm:$0xff] %v892
        %1021 = vst [vmem:[%s220 + $0xc0] sm:$0xff] %v893
        %1022 = vst [vmem:[%s220 + $0xc8] sm:$0xff] %v894
        %1023 = vst [vmem:[%s220 + $0xd0] sm:$0xff] %v895
        %1024 = vst [vmem:[%s220 + $0xd8] sm:$0xff] %v896
        %1025 = vst [vmem:[%s220 + $0xe0] sm:$0xff] %v897
        %1026 = vst [vmem:[%s220 + $0xe8] sm:$0xff] %v898
        %1027 = vst [vmem:[%s220 + $0xf0] sm:$0xff] %v899
        %1028 = vst [vmem:[%s220 + $0xf8] sm:$0xff] %v900
        %1029 = vst [vmem:[%s220 + $0x100] sm:$0xff] %v901
        %1030 = vst [vmem:[%s220 + $0x108] sm:$0xff] %v902
        %1031 = vst [vmem:[%s220 + $0x110] sm:$0xff] %v903
        %1032 = vst [vmem:[%s220 + $0x118] sm:$0xff] %v904
        %1033 = vst [vmem:[%s220 + $0x120] sm:$0xff] %v905
        %1034 = vst [vmem:[%s220 + $0x128] sm:$0xff] %v906
        %1035 = vst [vmem:[%s220 + $0x130] sm:$0xff] %v907
        %1036 = vst [vmem:[%s220 + $0x138] sm:$0xff] %v908
        %1037 = vst [vmem:[%s220 + $0x140] sm:$0xff] %v909
        %1038 = vst [vmem:[%s220 + $0x148] sm:$0xff] %v910
        %1039 = vst [vmem:[%s220 + $0x150] sm:$0xff] %v911
        %1040 = vst [vmem:[%s220 + $0x158] sm:$0xff] %v912
        %1041 = vst [vmem:[%s220 + $0x160] sm:$0xff] %v913
        %1042 = vst [vmem:[%s220 + $0x168] sm:$0xff] %v914
        %1043 = vst [vmem:[%s220 + $0x170] sm:$0xff] %v915
        %1044 = vst [vmem:[%s220 + $0x178] sm:$0xff] %v916
        %1045 = vst [vmem:[%s220 + $0x180] sm:$0xff] %v917
        %1046 = vst [vmem:[%s220 + $0x188] sm:$0xff] %v918
        %1047 = vst [vmem:[%s220 + $0x190] sm:$0xff] %v919
        %1048 = vst [vmem:[%s220 + $0x198] sm:$0xff] %v920
        %1049 = vst [vmem:[%s220 + $0x1a0] sm:$0xff] %v921
        %1050 = vst [vmem:[%s220 + $0x1a8] sm:$0xff] %v922
        %1051 = vst [vmem:[%s220 + $0x1b0] sm:$0xff] %v923
        %1052 = vst [vmem:[%s220 + $0x1b8] sm:$0xff] %v924
        %1053 = vst [vmem:[%s220 + $0x1c0] sm:$0xff] %v925
        %1054 = vst [vmem:[%s220 + $0x1c8] sm:$0xff] %v926
        %1055 = vst [vmem:[%s220 + $0x1d0] sm:$0xff] %v927
        %1056 = vst [vmem:[%s220 + $0x1d8] sm:$0xff] %v928
        %1057 = vst [vmem:[%s220 + $0x1e0] sm:$0xff] %v929
        %1058 = vst [vmem:[%s220 + $0x1e8] sm:$0xff] %v930
        %1059 = vst [vmem:[%s220 + $0x1f0] sm:$0xff] %v931
        %1060 = vst [vmem:[%s220 + $0x1f8] sm:$0xff] %v932
        %1061 = vst [vmem:[%s220 + $0x200] sm:$0xff] %v933
        %1062 = vst [vmem:[%s220 + $0x208] sm:$0xff] %v934
        %1063 = vst [vmem:[%s220 + $0x210] sm:$0xff] %v935
        %1064 = vst [vmem:[%s220 + $0x218] sm:$0xff] %v936
        %1065 = vst [vmem:[%s220 + $0x220] sm:$0xff] %v937
        %1066 = vst [vmem:[%s220 + $0x228] sm:$0xff] %v938
        %1067 = vst [vmem:[%s220 + $0x230] sm:$0xff] %v939
        %1068 = vst [vmem:[%s220 + $0x238] sm:$0xff] %v940
        %1069 = vst [vmem:[%s220 + $0x240] sm:$0xff] %v941
        %1070 = vst [vmem:[%s220 + $0x248] sm:$0xff] %v942
        %1071 = vst [vmem:[%s220 + $0x250] sm:$0xff] %v943
        %1072 = vst [vmem:[%s220 + $0x258] sm:$0xff] %v944
        %1073 = vst [vmem:[%s220 + $0x260] sm:$0xff] %v945
        %1074 = vst [vmem:[%s220 + $0x268] sm:$0xff] %v946
        %1075 = vst [vmem:[%s220 + $0x270] sm:$0xff] %v947
        %1076 = vst [vmem:[%s220 + $0x278] sm:$0xff] %v948
        %1077 = vst [vmem:[%s220 + $0x280] sm:$0xff] %v949
        %1078 = vst [vmem:[%s220 + $0x288] sm:$0xff] %v950
        %1079 = vst [vmem:[%s220 + $0x290] sm:$0xff] %v951
        %1080 = vst [vmem:[%s220 + $0x298] sm:$0xff] %v952
        %1081 = vst [vmem:[%s220 + $0x2a0] sm:$0xff] %v953
        %1082 = vst [vmem:[%s220 + $0x2a8] sm:$0xff] %v954
        %1083 = vst [vmem:[%s220 + $0x2b0] sm:$0xff] %v955
        %1084 = vst [vmem:[%s220 + $0x2b8] sm:$0xff] %v956
        %1085 = vst [vmem:[%s220 + $0x2c0] sm:$0xff] %v957
        %1086 = vst [vmem:[%s220 + $0x2c8] sm:$0xff] %v958
        %1087 = vst [vmem:[%s220 + $0x2d0] sm:$0xff] %v959
        %1088 = vst [vmem:[%s220 + $0x2d8] sm:$0xff] %v960
        %1089 = vst [vmem:[%s220 + $0x2e0] sm:$0xff] %v961
        %1090 = vst [vmem:[%s220 + $0x2e8] sm:$0xff] %v962
        %1091 = vst [vmem:[%s220 + $0x2f0] sm:$0xff] %v963
        %1092 = vst [vmem:[%s220 + $0x2f8] sm:$0xff] %v964
        %1093 = vst [vmem:[%s220 + $0x300] sm:$0xff] %v965
        %1094 = vst [vmem:[%s220 + $0x308] sm:$0xff] %v966
        %1095 = vst [vmem:[%s220 + $0x310] sm:$0xff] %v967
        %1096 = vst [vmem:[%s220 + $0x318] sm:$0xff] %v968
        %1097 = vst [vmem:[%s220 + $0x320] sm:$0xff] %v969
        %1098 = vst [vmem:[%s220 + $0x328] sm:$0xff] %v970
        %1099 = vst [vmem:[%s220 + $0x330] sm:$0xff] %v971
        %1100 = vst [vmem:[%s220 + $0x338] sm:$0xff] %v972
        %1101 = vst [vmem:[%s220 + $0x340] sm:$0xff] %v973
        %1102 = vst [vmem:[%s220 + $0x348] sm:$0xff] %v974
        %1103 = vst [vmem:[%s220 + $0x350] sm:$0xff] %v975
        %1104 = vst [vmem:[%s220 + $0x358] sm:$0xff] %v976
        %1105 = vst [vmem:[%s220 + $0x360] sm:$0xff] %v977
        %1106 = vst [vmem:[%s220 + $0x368] sm:$0xff] %v978
        %1107 = vst [vmem:[%s220 + $0x370] sm:$0xff] %v979
        %1108 = vst [vmem:[%s220 + $0x378] sm:$0xff] %v980
        %1109 = vst [vmem:[%s220 + $0x380] sm:$0xff] %v981
        %1110 = vst [vmem:[%s220 + $0x388] sm:$0xff] %v982
        %1111 = vst [vmem:[%s220 + $0x390] sm:$0xff] %v983
        %1112 = vst [vmem:[%s220 + $0x398] sm:$0xff] %v984
        %1113 = vst [vmem:[%s220 + $0x3a0] sm:$0xff] %v985
        %1114 = vst [vmem:[%s220 + $0x3a8] sm:$0xff] %v986
        %1115 = vst [vmem:[%s220 + $0x3b0] sm:$0xff] %v987
        %1116 = vst [vmem:[%s220 + $0x3b8] sm:$0xff] %v988
        %1117 = vst [vmem:[%s220 + $0x3c0] sm:$0xff] %v989
        %1118 = vst [vmem:[%s220 + $0x3c8] sm:$0xff] %v990
        %1119 = vst [vmem:[%s220 + $0x3d0] sm:$0xff] %v991
        %1120 = vst [vmem:[%s220 + $0x3d8] sm:$0xff] %v992
        %1121 = vst [vmem:[%s220 + $0x3e0] sm:$0xff] %v993
        %1122 = vst [vmem:[%s220 + $0x3e8] sm:$0xff] %v994
        %1123 = vst [vmem:[%s220 + $0x3f0] sm:$0xff] %v995
        %1124 = vst [vmem:[%s220 + $0x3f8] sm:$0xff] %v996
        %s1125 = sand.u32 %s121, 1
        %s1126 = scalar_lea.sflag [#allocation7], %s1125
        %s1127 = sand.u32 %s121, 1
        %s1128 = smul.addr %s1127, 1024
        %s1129 = scalar_lea.vmem [#allocation8], %s1128
        // Predicated region
        $region41: #{tpu_custom_call.1} parent=35 // pred_check
          %p1130 = pneg %p131
        $region42: #{tpu_custom_call.1} parent=35 // pred_check_branch
          %1132 = sbr.rel (%p1130) target = $region44
        $region43: #{tpu_custom_call.1} parent=35 // pred_region
          %s1133 = smul.u32 128, %s24
          %1135 = vsyncadd %s1126, 0
          %s1136 = smul.addr %s1133, 8
          %s1137 = scalar_lea.hbm %s4, %s1136
          %s1138 = sshll.u32 %s1129, 4
          %s1139 = int_to_ptr.vmem [resolvable:$true] %s1138
          %s1140 = sshll.u32 %s1137, 4
          %s1141 = int_to_ptr.hbm [resolvable:$true] %s1140
          %1146 = dma.vmem_to_hbm [thread:$0]  %s1139, 16384, %s1141, %s1126, 128, 128, 8
        $region44: #{tpu_custom_call.1} parent=35 // pred_fallthru
          _
      $region36: #{tpu_custom_call.1} parent=5 // pred_fallthru
        _
      %p1147 = scmp.le.s32.totalorder 2, %s19
      // Predicated region
      $region45: #{tpu_custom_call.1} parent=5 // pred_check
        %p1148 = pneg %p1147
      $region46: #{tpu_custom_call.1} parent=5 // pred_check_branch
        %1150 = sbr.rel (%p1148) target = $region48
      $region47: #{tpu_custom_call.1} parent=5 // pred_region
        %s1151 = ssub.s32 %s19, 2
        // Predicated region
        $region49: #{tpu_custom_call.1} parent=47 // pred_check
          %p1152 = pneg %p137
        $region50: #{tpu_custom_call.1} parent=47 // pred_check_branch
          %1154 = sbr.rel (%p1152) target = $region52
        $region51: #{tpu_custom_call.1} parent=47 // pred_region
          %s1155 = sand.u32 %s122, 1
          %s1156 = scalar_lea.sflag [#allocation7], %s1155
          %s1157 = sand.u32 %s122, 1
          %s1158 = smul.addr %s1157, 1024
          %s1159 = scalar_lea.vmem [#allocation8], %s1158
          %1161 = dma.done %s1156, 16384
        $region52: #{tpu_custom_call.1} parent=47 // pred_fallthru
          _
      $region48: #{tpu_custom_call.1} parent=5 // pred_fallthru
        _
    $region6: #{tpu_custom_call.1} parent=1 // loop_footer
      %s23 = sadd.s32 1, %s19
    $region7: #{tpu_custom_call.1} parent=1 // loop_footer_branch
      %18 = sbr.rel target = $region3
    $region8: #{tpu_custom_call.1} parent=1 // loop_exit
      _
    %1162 = vsyncpa [#allocation6], 1
    %s1163 = scalar_lea.sflag [#allocation6], 1
    %1164 = vsyncpa %s1163, 1
    %1165 = vsyncpa [#allocation7], 1
    %s1166 = scalar_lea.sflag [#allocation7], 1
    %1167 = vsyncpa %s1166, 1

</llo_original>
